<compile_context>
chip_gen: v5e
topology: v5e:2x2
jax: 0.10.0
libtpu: 0.0.40
codegen_flags: <defaults>
</compile_context>

<pallas_src>
import functools

import jax
import jax.numpy as jnp
from jax.experimental import pallas as pl
from jax.experimental.pallas import tpu as pltpu


# ----------------------------- configuration --------------------------------
class Configs:
    verbose = False
    seq_len = 8
    label_len = 8
    batch_size = 2
    kernel_size = 2          # module's size arithmetic (L - d) implies k == 2
    num_kernels = 4
    enc_in = 4
    gradient_checkpoint = False   # no effect on forward math


DILATIONS = (1, 2, 3)
SEG = 128                        # lane-aligned segment width per (dilation, filter)


def _conv_out_len(L, k, d):
    return L - d * (k - 1)


# ------------------------------- the kernel ---------------------------------
def _dffn_kernel(x_ref, cw_ref, wd_ref, bd_ref, out_ref, *,
                 num_filters, dilations, seg, conv_rows):
    """Fused dilated-conv + dense chain.

    x_ref  : (B, 2*seg)   input, zero-padded past L lanes
    cw_ref : (3, nseg*seg) rows = [tap0 weights, tap1 weights, bias], each value
                            repeated across its 128-lane segment
    wd_ref : (conv_rows + 4*seg, seg) all dense weights, out-dims padded to 128
    bd_ref : (5, seg)      dense biases, padded to 128
    out_ref: (B, seg)      padded output (first label_len lanes are real)
    """
    F = num_filters
    nseg = len(dilations) * F

    # tap j=0 (no shift) and tap j=1 per dilation (static width-128 windows at
    # offsets 1/2/3; computed once, reused for all filters). Lanes past L_d in each
    # segment carry garbage, but they hit zero rows of the repacked W1 below.
    x0 = x_ref[:, 0:seg]                                           # (B, 128)
    x0_rep = jnp.concatenate([x0] * nseg, axis=1)                  # (B, nseg*128)
    x1_rep = jnp.concatenate(
        [jnp.concatenate([x_ref[:, d:d + seg]] * F, axis=1) for d in dilations],
        axis=1)                                                    # (B, nseg*128)

    # all 3 dilations x F filters in two multiplies + two adds
    h = x0_rep * cw_ref[0:1, :] + x1_rep * cw_ref[1:2, :] + cw_ref[2:3, :]

    # dense chain: relu(h @ W + b) x 4, then linear output. Weights are packed
    # row-wise in one slab; static sublane-aligned slices are free views.
    rows = (conv_rows, seg, seg, seg, seg)
    r = 0
    for i in range(5):
        w = wd_ref[r:r + rows[i], :]
        h = jnp.dot(h, w, preferred_element_type=jnp.float32) + bd_ref[i:i + 1, :]
        if i < 4:
            h = jnp.maximum(h, 0.0)
        r += rows[i]
    out_ref[...] = h                                               # full 128-lane store


# ------------------------------ parameters -----------------------------------
def make_params(cfg, key):
    """Natural (unpacked) parameters, also used by the pure-JAX reference."""
    L = cfg.seq_len * cfg.enc_in
    k = cfg.kernel_size
    assert k == 2, "module size arithmetic assumes kernel_size == 2"
    F = cfg.num_kernels
    input_size = int((L * 3 - 1 - 2 - 3) * F)          # matches the module's arithmetic
    dims = [input_size, input_size // 4, input_size // 8, input_size // 16, 64,
            cfg.label_len]

    keys = jax.random.split(key, 12)
    params = {}
    params["conv_w"] = jax.random.normal(keys[0], (len(DILATIONS), F, k),
                                         jnp.float32) * 0.1
    params["conv_b"] = jax.random.normal(keys[1], (len(DILATIONS), F),
                                         jnp.float32) * 0.1
    for i in range(5):
        fan_in, fan_out = dims[i], dims[i + 1]
        params[f"W{i+1}"] = (jax.random.normal(keys[2 + 2 * i], (fan_in, fan_out),
                                               jnp.float32) * (1.0 / fan_in ** 0.5))
        params[f"b{i+1}"] = (jax.random.normal(keys[3 + 2 * i], (fan_out,),
                                               jnp.float32) * 0.05)
    return params


def pack_params(cfg, params):
    """One-time layout plumbing: lane-aligned conv weights, repacked/padded dense
    weights concatenated into single VMEM slabs."""
    L = cfg.seq_len * cfg.enc_in
    k = cfg.kernel_size
    F = cfg.num_kernels
    nseg = len(DILATIONS) * F

    cw = params["conv_w"]                               # (3, F, k)
    cb = params["conv_b"]                               # (3, F)
    conv_slab = jnp.stack([
        jnp.repeat(cw[:, :, 0].reshape(-1), SEG),       # tap-0 weights per segment
        jnp.repeat(cw[:, :, 1].reshape(-1), SEG),       # tap-1 weights per segment
        jnp.repeat(cb.reshape(-1), SEG),                # bias per segment
    ], axis=0)                                          # (3, nseg*SEG)

    # W1: (360, out1) -> (nseg*SEG, 128); each (dilation, filter) segment starts at
    # a 128-lane boundary; padded rows/cols are zero so padded activations drop out.
    W1 = params["W1"]
    W1p = jnp.zeros((nseg * SEG, SEG), jnp.float32)
    off = 0
    for di, d in enumerate(DILATIONS):
        L_d = _conv_out_len(L, k, d)
        for f in range(F):
            s = di * F + f
            W1p = W1p.at[s * SEG:s * SEG + L_d, :W1.shape[1]].set(W1[off:off + L_d, :])
            off += L_d

    w_blocks = [W1p]
    for i in range(2, 6):
        W = params[f"W{i}"]
        blk = jnp.zeros((SEG, SEG), jnp.float32).at[:W.shape[0], :W.shape[1]].set(W)
        w_blocks.append(blk)
    W_all = jnp.concatenate(w_blocks, axis=0)           # (nseg*SEG + 4*SEG, SEG)

    b_rows = []
    for i in range(1, 6):
        b = params[f"b{i}"]
        b_rows.append(jnp.zeros((SEG,), jnp.float32).at[:b.shape[0]].set(b))
    b_all = jnp.stack(b_rows, axis=0)                   # (5, SEG)

    return {"conv_slab": conv_slab, "W_all": W_all, "b_all": b_all}


# ------------------------------- wrapper -------------------------------------
@functools.partial(jax.jit, static_argnums=(0,))
def dffn_forward(cfg, packed, inputs, _x, y, _y):
    """Mirrors Model.forward(inputs, _x, y, _y); only `inputs` is used."""
    B = cfg.batch_size
    L = cfg.seq_len * cfg.enc_in
    F = cfg.num_kernels
    assert L <= SEG
    nseg = len(DILATIONS) * F

    x2d = inputs.reshape(B, L).astype(jnp.float32)          # torch .view(B, 1, -1)
    x_pad = jnp.zeros((B, 2 * SEG), jnp.float32).at[:, :L].set(x2d)

    kernel = functools.partial(_dffn_kernel, num_filters=F, dilations=DILATIONS,
                               seg=SEG, conv_rows=nseg * SEG)

    vmem = pl.BlockSpec(memory_space=pltpu.MemorySpace.VMEM)

    out_pad = pl.pallas_call(
        kernel,
        out_shape=jax.ShapeDtypeStruct((B, SEG), jnp.float32),
        in_specs=[vmem, vmem, vmem, vmem],
        out_specs=vmem,
    )(x_pad, packed["conv_slab"], packed["W_all"], packed["b_all"])

    # PyTorch output shape is (B, 1, label_len) since convoluted is (B, 1, ·)
    return out_pad[:, :cfg.label_len].reshape(B, 1, cfg.label_len)


# ------------------------- pure-JAX reference (check) ------------------------
def dffn_reference(cfg, params, inputs):
    B = cfg.batch_size
    L = cfg.seq_len * cfg.enc_in
    F = cfg.num_kernels
    k = cfg.kernel_size
    x = inputs.reshape(B, L).astype(jnp.float32)
    cw = params["conv_w"]
    cb = params["conv_b"]
    pieces = []
    for di, d in enumerate(DILATIONS):
        L_d = _conv_out_len(L, k, d)
        taps = jnp.stack([x[:, j * d: j * d + L_d] for j in range(k)], axis=1)
        conv = jnp.einsum("bkl,fk->bfl", taps, cw[di]) + cb[di][None, :, None]
        pieces.append(conv.reshape(B, -1))
    h = jnp.concatenate(pieces, axis=1)
    for i in range(1, 5):
        h = jnp.maximum(h @ params[f"W{i}"] + params[f"b{i}"], 0.0)
    out = h @ params["W5"] + params["b5"]
    return out.reshape(B, 1, cfg.label_len)


# ---------------------------------- main -------------------------------------
if __name__ == "__main__":
    cfg = Configs()
    key = jax.random.PRNGKey(0)
    pkey, xkey, ykey = jax.random.split(key, 3)

    params = make_params(cfg, pkey)
    packed = pack_params(cfg, params)

    inputs = jax.random.normal(xkey, (cfg.batch_size, cfg.seq_len, cfg.enc_in),
                               jnp.float32)
    # unused positional args, kept to mirror forward(inputs, _x, y, _y)
    _x = jnp.zeros((cfg.batch_size, cfg.seq_len, 1), jnp.float32)
    y = jax.random.normal(ykey, (cfg.batch_size, cfg.label_len, cfg.enc_in),
                          jnp.float32)
    _y = jnp.zeros((cfg.batch_size, cfg.label_len, 1), jnp.float32)

    out = dffn_forward(cfg, packed, inputs, _x, y, _y)
    out = jax.block_until_ready(out)

    ref = dffn_reference(cfg, params, inputs)
    assert out.shape == (cfg.batch_size, 1, cfg.label_len), out.shape
    assert jnp.allclose(out, ref, atol=1e-2, rtol=1e-2), "mismatch vs reference"

    print("KERNEL_OK")
</pallas_src>

<mosaic_0001>
module attributes {stable_mosaic.version = 11 : i64} {
  func.func @_dffn_kernel(%arg0: memref<2x256xf32, #tpu.memory_space<vmem>>, %arg1: memref<3x1536xf32, #tpu.memory_space<vmem>>, %arg2: memref<2048x128xf32, #tpu.memory_space<vmem>>, %arg3: memref<5x128xf32, #tpu.memory_space<vmem>>, %arg4: memref<2x128xf32, #tpu.memory_space<vmem>>) attributes {dimension_semantics = [], scalar_prefetch = 0 : i64, scratch_operands = 0 : i64, tpu.core_type = #tpu.core_type<tc>} {
    %c0 = arith.constant 0 : index
    %c0_0 = arith.constant 0 : index
    %0 = vector.load %arg0[%c0, %c0_0] : memref<2x256xf32, #tpu.memory_space<vmem>>, vector<2x128xf32>
    %1 = tpu.concatenate %0, %0, %0, %0, %0, %0, %0, %0, %0, %0, %0, %0 in 1 : vector<2x128xf32>, vector<2x128xf32>, vector<2x128xf32>, vector<2x128xf32>, vector<2x128xf32>, vector<2x128xf32>, vector<2x128xf32>, vector<2x128xf32>, vector<2x128xf32>, vector<2x128xf32>, vector<2x128xf32>, vector<2x128xf32> -> vector<2x1536xf32>
    %c0_1 = arith.constant 0 : index
    %c1 = arith.constant 1 : index
    %2 = vector.load %arg0[%c0_1, %c1] : memref<2x256xf32, #tpu.memory_space<vmem>>, vector<2x128xf32>
    %3 = tpu.concatenate %2, %2, %2, %2 in 1 : vector<2x128xf32>, vector<2x128xf32>, vector<2x128xf32>, vector<2x128xf32> -> vector<2x512xf32>
    %c0_2 = arith.constant 0 : index
    %c2 = arith.constant 2 : index
    %4 = vector.load %arg0[%c0_2, %c2] : memref<2x256xf32, #tpu.memory_space<vmem>>, vector<2x128xf32>
    %5 = tpu.concatenate %4, %4, %4, %4 in 1 : vector<2x128xf32>, vector<2x128xf32>, vector<2x128xf32>, vector<2x128xf32> -> vector<2x512xf32>
    %c0_3 = arith.constant 0 : index
    %c3 = arith.constant 3 : index
    %6 = vector.load %arg0[%c0_3, %c3] : memref<2x256xf32, #tpu.memory_space<vmem>>, vector<2x128xf32>
    %7 = tpu.concatenate %6, %6, %6, %6 in 1 : vector<2x128xf32>, vector<2x128xf32>, vector<2x128xf32>, vector<2x128xf32> -> vector<2x512xf32>
    %8 = tpu.concatenate %3, %5, %7 in 1 : vector<2x512xf32>, vector<2x512xf32>, vector<2x512xf32> -> vector<2x1536xf32>
    %c0_4 = arith.constant 0 : index
    %c0_5 = arith.constant 0 : index
    %9 = vector.load %arg1[%c0_4, %c0_5] : memref<3x1536xf32, #tpu.memory_space<vmem>>, vector<1x1536xf32>
    %10 = vector.broadcast %9 : vector<1x1536xf32> to vector<2x1536xf32>
    %11 = arith.mulf %1, %10 : vector<2x1536xf32>
    %c1_6 = arith.constant 1 : index
    %c0_7 = arith.constant 0 : index
    %12 = vector.load %arg1[%c1_6, %c0_7] : memref<3x1536xf32, #tpu.memory_space<vmem>>, vector<1x1536xf32>
    %13 = vector.broadcast %12 : vector<1x1536xf32> to vector<2x1536xf32>
    %14 = arith.mulf %8, %13 : vector<2x1536xf32>
    %15 = arith.addf %11, %14 : vector<2x1536xf32>
    %c2_8 = arith.constant 2 : index
    %c0_9 = arith.constant 0 : index
    %16 = vector.load %arg1[%c2_8, %c0_9] : memref<3x1536xf32, #tpu.memory_space<vmem>>, vector<1x1536xf32>
    %17 = vector.broadcast %16 : vector<1x1536xf32> to vector<2x1536xf32>
    %18 = arith.addf %15, %17 : vector<2x1536xf32>
    %c0_10 = arith.constant 0 : index
    %c0_11 = arith.constant 0 : index
    %19 = vector.load %arg2[%c0_10, %c0_11] : memref<2048x128xf32, #tpu.memory_space<vmem>>, vector<1536x128xf32>
    %cst = arith.constant dense<0.000000e+00> : vector<2x128xf32>
    %20 = tpu.matmul %18, %19, %cst {dimension_numbers = #tpu.dot_dimension_numbers<[1], [0], [0], [1], [0, 0, 1, 1], [], []>} : vector<2x1536xf32>, vector<1536x128xf32>, vector<2x128xf32> -> vector<2x128xf32>
    %c0_12 = arith.constant 0 : index
    %c0_13 = arith.constant 0 : index
    %21 = vector.load %arg3[%c0_12, %c0_13] : memref<5x128xf32, #tpu.memory_space<vmem>>, vector<1x128xf32>
    %22 = vector.broadcast %21 : vector<1x128xf32> to vector<2x128xf32>
    %23 = arith.addf %20, %22 : vector<2x128xf32>
    %cst_14 = arith.constant 0.000000e+00 : f32
    %24 = vector.broadcast %cst_14 : f32 to vector<2x128xf32>
    %25 = arith.maximumf %23, %24 : vector<2x128xf32>
    %c1536 = arith.constant 1536 : index
    %c0_15 = arith.constant 0 : index
    %26 = vector.load %arg2[%c1536, %c0_15] : memref<2048x128xf32, #tpu.memory_space<vmem>>, vector<128x128xf32>
    %cst_16 = arith.constant dense<0.000000e+00> : vector<2x128xf32>
    %27 = tpu.matmul %25, %26, %cst_16 {dimension_numbers = #tpu.dot_dimension_numbers<[1], [0], [0], [1], [0, 0, 1, 1], [], []>} : vector<2x128xf32>, vector<128x128xf32>, vector<2x128xf32> -> vector<2x128xf32>
    %c1_17 = arith.constant 1 : index
    %c0_18 = arith.constant 0 : index
    %28 = vector.load %arg3[%c1_17, %c0_18] : memref<5x128xf32, #tpu.memory_space<vmem>>, vector<1x128xf32>
    %29 = vector.broadcast %28 : vector<1x128xf32> to vector<2x128xf32>
    %30 = arith.addf %27, %29 : vector<2x128xf32>
    %cst_19 = arith.constant 0.000000e+00 : f32
    %31 = vector.broadcast %cst_19 : f32 to vector<2x128xf32>
    %32 = arith.maximumf %30, %31 : vector<2x128xf32>
    %c1664 = arith.constant 1664 : index
    %c0_20 = arith.constant 0 : index
    %33 = vector.load %arg2[%c1664, %c0_20] : memref<2048x128xf32, #tpu.memory_space<vmem>>, vector<128x128xf32>
    %cst_21 = arith.constant dense<0.000000e+00> : vector<2x128xf32>
    %34 = tpu.matmul %32, %33, %cst_21 {dimension_numbers = #tpu.dot_dimension_numbers<[1], [0], [0], [1], [0, 0, 1, 1], [], []>} : vector<2x128xf32>, vector<128x128xf32>, vector<2x128xf32> -> vector<2x128xf32>
    %c2_22 = arith.constant 2 : index
    %c0_23 = arith.constant 0 : index
    %35 = vector.load %arg3[%c2_22, %c0_23] : memref<5x128xf32, #tpu.memory_space<vmem>>, vector<1x128xf32>
    %36 = vector.broadcast %35 : vector<1x128xf32> to vector<2x128xf32>
    %37 = arith.addf %34, %36 : vector<2x128xf32>
    %cst_24 = arith.constant 0.000000e+00 : f32
    %38 = vector.broadcast %cst_24 : f32 to vector<2x128xf32>
    %39 = arith.maximumf %37, %38 : vector<2x128xf32>
    %c1792 = arith.constant 1792 : index
    %c0_25 = arith.constant 0 : index
    %40 = vector.load %arg2[%c1792, %c0_25] : memref<2048x128xf32, #tpu.memory_space<vmem>>, vector<128x128xf32>
    %cst_26 = arith.constant dense<0.000000e+00> : vector<2x128xf32>
    %41 = tpu.matmul %39, %40, %cst_26 {dimension_numbers = #tpu.dot_dimension_numbers<[1], [0], [0], [1], [0, 0, 1, 1], [], []>} : vector<2x128xf32>, vector<128x128xf32>, vector<2x128xf32> -> vector<2x128xf32>
    %c3_27 = arith.constant 3 : index
    %c0_28 = arith.constant 0 : index
    %42 = vector.load %arg3[%c3_27, %c0_28] : memref<5x128xf32, #tpu.memory_space<vmem>>, vector<1x128xf32>
    %43 = vector.broadcast %42 : vector<1x128xf32> to vector<2x128xf32>
    %44 = arith.addf %41, %43 : vector<2x128xf32>
    %cst_29 = arith.constant 0.000000e+00 : f32
    %45 = vector.broadcast %cst_29 : f32 to vector<2x128xf32>
    %46 = arith.maximumf %44, %45 : vector<2x128xf32>
    %c1920 = arith.constant 1920 : index
    %c0_30 = arith.constant 0 : index
    %47 = vector.load %arg2[%c1920, %c0_30] : memref<2048x128xf32, #tpu.memory_space<vmem>>, vector<128x128xf32>
    %cst_31 = arith.constant dense<0.000000e+00> : vector<2x128xf32>
    %48 = tpu.matmul %46, %47, %cst_31 {dimension_numbers = #tpu.dot_dimension_numbers<[1], [0], [0], [1], [0, 0, 1, 1], [], []>} : vector<2x128xf32>, vector<128x128xf32>, vector<2x128xf32> -> vector<2x128xf32>
    %c4 = arith.constant 4 : index
    %c0_32 = arith.constant 0 : index
    %49 = vector.load %arg3[%c4, %c0_32] : memref<5x128xf32, #tpu.memory_space<vmem>>, vector<1x128xf32>
    %50 = vector.broadcast %49 : vector<1x128xf32> to vector<2x128xf32>
    %51 = arith.addf %48, %50 : vector<2x128xf32>
    %c0_33 = arith.constant 0 : index
    %c0_34 = arith.constant 0 : index
    %52 = vector.load %arg4[%c0_33, %c0_34] : memref<2x128xf32, #tpu.memory_space<vmem>>, vector<2x128xf32>
    tpu.vector_store %arg4[%c0_33, %c0_34], %51 {strides = array<i32>} : memref<2x128xf32, #tpu.memory_space<vmem>>, vector<2x128xf32>,
    return
  }
}

</mosaic_0001>

<llo_original>
// kernel: dffn_forward.1
$region0: #{dffn_forward.1}
  #allocation0 [shape = 'u32[]', space=smem, size = 0x4, offset = 0x4, fixed_abs, tag = 'smem constant byte address 0x4 - core index']
  #allocation1 [shape = 'u32[72,128]{1,0:T(1,128)}', space=vmem, size = 0x9000, scoped, tag = 'internal scratch']
  %s0 = inlined_call_operand.vmem [shape: f32[2,256], index: 0, kind: input, shape index: {}]
  %s1 = inlined_call_operand.vmem [shape: f32[3,1536], index: 1, kind: input, shape index: {}]
  %s2 = inlined_call_operand.hbm [shape: f32[2048,128], index: 2, kind: input, shape index: {}]
  %s3 = inlined_call_operand.vmem [shape: f32[5,128], index: 3, kind: input, shape index: {}]
  %s4 = inlined_call_operand.hbm [shape: f32[2,128], index: 4, kind: output, shape index: {}]
  %s5 = sld [smem:[#allocation0]]
  $region30: #{dffn_forward.1} parent=0
    _
  %s7 = ssub.s32 1, %s5
  %s8 = scalar_select 0, %s7, %s5
  $region1: #{dffn_forward.1} parent=0
    #allocation2 [shape = 'u8[1048576]{0}', space=vmem, size = 0x100000, scoped, tag = 'input window, operand 2, single buffered']
    #allocation3 [shape = 's32[1]{0}', space=sflag, size = 0x4, scoped, tag = 'scoped memory for dffn_forward.1']
    #allocation4 [shape = 's32[1]{0}', space=sflag, size = 0x4, scoped, tag = 'scoped memory for dffn_forward.1']
    #allocation5 [shape = 'u8[1024]{0}', space=vmem, size = 0x400, scoped, tag = 'output window, operand 0, single buffered']
    %9 = vsyncpa [#allocation3], 0
    %10 = vsyncpa [#allocation4], 0
    // Predicated region
    $region2: #{dffn_forward.1} parent=1 // pred_check
      _
    $region3: #{dffn_forward.1} parent=1 // pred_check_branch
      %12 = sbr.rel (0) target = $region5
    $region4: #{dffn_forward.1} parent=1 // pred_region
      _
    $region5: #{dffn_forward.1} parent=1 // pred_fallthru
      _
    // Predicated region
    $region6: #{dffn_forward.1} parent=1 // pred_check
      _
    $region7: #{dffn_forward.1} parent=1 // pred_check_branch
      %14 = sbr.rel (0) target = $region9
    $region8: #{dffn_forward.1} parent=1 // pred_region
      _
    $region9: #{dffn_forward.1} parent=1 // pred_fallthru
      _
    // Predicated region
    $region10: #{dffn_forward.1} parent=1 // pred_check
      _
    $region11: #{dffn_forward.1} parent=1 // pred_check_branch
      %16 = sbr.rel (0) target = $region13
    $region12: #{dffn_forward.1} parent=1 // pred_region
      %18 = vsyncadd [#allocation3], 0
      %s19 = sshll.u32 %s2, 4
      %s20 = int_to_ptr.hbm [resolvable:$true] %s19
      %s21 = sshll.u32 [#allocation2], 4
      %s22 = int_to_ptr.vmem [resolvable:$true] %s21
      %27 = dma.hbm_to_vmem [thread:$0]  %s20, 32768, %s22, [#allocation3], 128, 128, 8
    $region13: #{dffn_forward.1} parent=1 // pred_fallthru
      _
    // Predicated region
    $region14: #{dffn_forward.1} parent=1 // pred_check
      _
    $region15: #{dffn_forward.1} parent=1 // pred_check_branch
      %29 = sbr.rel (0) target = $region17
    $region16: #{dffn_forward.1} parent=1 // pred_region
      _
    $region17: #{dffn_forward.1} parent=1 // pred_fallthru
      _
    // Predicated region
    $region18: #{dffn_forward.1} parent=1 // pred_check
      _
    $region19: #{dffn_forward.1} parent=1 // pred_check_branch
      %31 = sbr.rel (0) target = $region21
    $region20: #{dffn_forward.1} parent=1 // pred_region
      %33 = dma.done [#allocation3], 32768
    $region21: #{dffn_forward.1} parent=1 // pred_fallthru
      _
    %v34 = vld [vmem:[%s0] sm:$0x3]
    %v35 = vld [vmem:[%s0] sm:$0xf]
    %37 = vst [vmem:[#allocation1] ss:$4 sm:$0xff] %v35
    %v38 = vld.sshfl [vmem:[#allocation1] sm:$0xff pattern:$0x73625140]
    %v39 = vld.sshfl [vmem:[#allocation1 + $0x8] sm:$0xff pattern:$0x73625140]
    %40 = vrot.lane.b32.xlu0 %v38, 127
    %v41 = vpop.permute.xlu0 %40
    %42 = vrot.lane.b32.xlu0 %v39, 127
    %v43 = vpop.permute.xlu0 %42
    %vm44 = vcmask 1039360
    %v45 = vsel %vm44, %v41, %v43
    %47 = vst [vmem:[#allocation1] ss:$4 sm:$0xff] %v35
    %v48 = vld.sshfl [vmem:[#allocation1] sm:$0xff pattern:$0x73625140]
    %v49 = vld.sshfl [vmem:[#allocation1 + $0x8] sm:$0xff pattern:$0x73625140]
    %50 = vrot.lane.b32.xlu0 %v48, 127
    %v51 = vpop.permute.xlu0 %50
    %52 = vrot.lane.b32.xlu0 %v49, 127
    %v53 = vpop.permute.xlu0 %52
    %v54 = vsel %vm44, %v51, %v53
    %56 = vst [vmem:[#allocation1] ss:$4 sm:$0xff] %v35
    %v57 = vld.sshfl [vmem:[#allocation1] sm:$0xff pattern:$0x73625140]
    %v58 = vld.sshfl [vmem:[#allocation1 + $0x8] sm:$0xff pattern:$0x73625140]
    %59 = vrot.lane.b32.xlu0 %v57, 127
    %v60 = vpop.permute.xlu0 %59
    %61 = vrot.lane.b32.xlu0 %v58, 127
    %v62 = vpop.permute.xlu0 %61
    %v63 = vsel %vm44, %v60, %v62
    %65 = vst [vmem:[#allocation1] ss:$4 sm:$0xff] %v35
    %v66 = vld.sshfl [vmem:[#allocation1] sm:$0xff pattern:$0x73625140]
    %v67 = vld.sshfl [vmem:[#allocation1 + $0x8] sm:$0xff pattern:$0x73625140]
    %68 = vrot.lane.b32.xlu0 %v66, 127
    %v69 = vpop.permute.xlu0 %68
    %70 = vrot.lane.b32.xlu0 %v67, 127
    %v71 = vpop.permute.xlu0 %70
    %v72 = vsel %vm44, %v69, %v71
    %v74 = vld [vmem:[%s0] sm:$0xf]
    %76 = vst [vmem:[#allocation1] ss:$4 sm:$0xff] %v74
    %v77 = vld.sshfl [vmem:[#allocation1] sm:$0xff pattern:$0x73625140]
    %v78 = vld.sshfl [vmem:[#allocation1 + $0x8] sm:$0xff pattern:$0x73625140]
    %79 = vrot.lane.b32.xlu0 %v77, 126
    %v80 = vpop.permute.xlu0 %79
    %81 = vrot.lane.b32.xlu0 %v78, 126
    %v82 = vpop.permute.xlu0 %81
    %vm83 = vcmask 1031168
    %v84 = vsel %vm83, %v80, %v82
    %86 = vst [vmem:[#allocation1] ss:$4 sm:$0xff] %v74
    %v87 = vld.sshfl [vmem:[#allocation1] sm:$0xff pattern:$0x73625140]
    %v88 = vld.sshfl [vmem:[#allocation1 + $0x8] sm:$0xff pattern:$0x73625140]
    %89 = vrot.lane.b32.xlu0 %v87, 126
    %v90 = vpop.permute.xlu0 %89
    %91 = vrot.lane.b32.xlu0 %v88, 126
    %v92 = vpop.permute.xlu0 %91
    %v93 = vsel %vm83, %v90, %v92
    %95 = vst [vmem:[#allocation1] ss:$4 sm:$0xff] %v74
    %v96 = vld.sshfl [vmem:[#allocation1] sm:$0xff pattern:$0x73625140]
    %v97 = vld.sshfl [vmem:[#allocation1 + $0x8] sm:$0xff pattern:$0x73625140]
    %98 = vrot.lane.b32.xlu0 %v96, 126
    %v99 = vpop.permute.xlu0 %98
    %100 = vrot.lane.b32.xlu0 %v97, 126
    %v101 = vpop.permute.xlu0 %100
    %v102 = vsel %vm83, %v99, %v101
    %104 = vst [vmem:[#allocation1] ss:$4 sm:$0xff] %v74
    %v105 = vld.sshfl [vmem:[#allocation1] sm:$0xff pattern:$0x73625140]
    %v106 = vld.sshfl [vmem:[#allocation1 + $0x8] sm:$0xff pattern:$0x73625140]
    %107 = vrot.lane.b32.xlu0 %v105, 126
    %v108 = vpop.permute.xlu0 %107
    %109 = vrot.lane.b32.xlu0 %v106, 126
    %v110 = vpop.permute.xlu0 %109
    %v111 = vsel %vm83, %v108, %v110
    %v113 = vld [vmem:[%s0] sm:$0xf]
    %115 = vst [vmem:[#allocation1] ss:$4 sm:$0xff] %v113
    %v116 = vld.sshfl [vmem:[#allocation1] sm:$0xff pattern:$0x73625140]
    %v117 = vld.sshfl [vmem:[#allocation1 + $0x8] sm:$0xff pattern:$0x73625140]
    %118 = vrot.lane.b32.xlu0 %v116, 125
    %v119 = vpop.permute.xlu0 %118
    %120 = vrot.lane.b32.xlu0 %v117, 125
    %v121 = vpop.permute.xlu0 %120
    %vm122 = vcmask 1022976
    %v123 = vsel %vm122, %v119, %v121
    %125 = vst [vmem:[#allocation1] ss:$4 sm:$0xff] %v113
    %v126 = vld.sshfl [vmem:[#allocation1] sm:$0xff pattern:$0x73625140]
    %v127 = vld.sshfl [vmem:[#allocation1 + $0x8] sm:$0xff pattern:$0x73625140]
    %128 = vrot.lane.b32.xlu0 %v126, 125
    %v129 = vpop.permute.xlu0 %128
    %130 = vrot.lane.b32.xlu0 %v127, 125
    %v131 = vpop.permute.xlu0 %130
    %v132 = vsel %vm122, %v129, %v131
    %134 = vst [vmem:[#allocation1] ss:$4 sm:$0xff] %v113
    %v135 = vld.sshfl [vmem:[#allocation1] sm:$0xff pattern:$0x73625140]
    %v136 = vld.sshfl [vmem:[#allocation1 + $0x8] sm:$0xff pattern:$0x73625140]
    %137 = vrot.lane.b32.xlu0 %v135, 125
    %v138 = vpop.permute.xlu0 %137
    %139 = vrot.lane.b32.xlu0 %v136, 125
    %v140 = vpop.permute.xlu0 %139
    %v141 = vsel %vm122, %v138, %v140
    %143 = vst [vmem:[#allocation1] ss:$4 sm:$0xff] %v113
    %v144 = vld.sshfl [vmem:[#allocation1] sm:$0xff pattern:$0x73625140]
    %v145 = vld.sshfl [vmem:[#allocation1 + $0x8] sm:$0xff pattern:$0x73625140]
    %146 = vrot.lane.b32.xlu0 %v144, 125
    %v147 = vpop.permute.xlu0 %146
    %148 = vrot.lane.b32.xlu0 %v145, 125
    %v149 = vpop.permute.xlu0 %148
    %v150 = vsel %vm122, %v147, %v149
    %v152 = vld [vmem:[%s1] ss:$4 sm:$0xff]
    %s153 = scalar_lea.vmem %s1, 32
    %v154 = vld [vmem:[%s153] ss:$4 sm:$0xf]
    %v157 = vperm.slane %v152, 0
    %v158 = vperm.slane %v152, 1
    %v159 = vperm.slane %v152, 2
    %v160 = vperm.slane %v152, 3
    %v161 = vperm.slane %v152, 4
    %v162 = vperm.slane %v152, 5
    %v163 = vperm.slane %v152, 6
    %v164 = vperm.slane %v152, 7
    %v165 = vperm.slane %v154, 0
    %v166 = vperm.slane %v154, 1
    %v167 = vperm.slane %v154, 2
    %v168 = vperm.slane %v154, 3
    %v181 = vmul.f32 %v34, %v157
    %v182 = vmul.f32 %v34, %v158
    %v183 = vmul.f32 %v34, %v159
    %v184 = vmul.f32 %v34, %v160
    %v185 = vmul.f32 %v34, %v161
    %v186 = vmul.f32 %v34, %v162
    %v187 = vmul.f32 %v34, %v163
    %v188 = vmul.f32 %v34, %v164
    %v189 = vmul.f32 %v34, %v165
    %v190 = vmul.f32 %v34, %v166
    %v191 = vmul.f32 %v34, %v167
    %v192 = vmul.f32 %v34, %v168
    %s193 = scalar_lea.vmem %s1, 1
    %v194 = vld [vmem:[%s193] ss:$4 sm:$0xff]
    %s195 = scalar_lea.vmem %s1, 33
    %v196 = vld [vmem:[%s195] ss:$4 sm:$0xf]
    %v199 = vperm.slane %v194, 0
    %v200 = vperm.slane %v194, 1
    %v201 = vperm.slane %v194, 2
    %v202 = vperm.slane %v194, 3
    %v203 = vperm.slane %v194, 4
    %v204 = vperm.slane %v194, 5
    %v205 = vperm.slane %v194, 6
    %v206 = vperm.slane %v194, 7
    %v207 = vperm.slane %v196, 0
    %v208 = vperm.slane %v196, 1
    %v209 = vperm.slane %v196, 2
    %v210 = vperm.slane %v196, 3
    %v223 = vmul.f32 %v45, %v199
    %v224 = vmul.f32 %v54, %v200
    %v225 = vmul.f32 %v63, %v201
    %v226 = vmul.f32 %v72, %v202
    %v227 = vmul.f32 %v84, %v203
    %v228 = vmul.f32 %v93, %v204
    %v229 = vmul.f32 %v102, %v205
    %v230 = vmul.f32 %v111, %v206
    %v231 = vmul.f32 %v123, %v207
    %v232 = vmul.f32 %v132, %v208
    %v233 = vmul.f32 %v141, %v209
    %v234 = vmul.f32 %v150, %v210
    %v235 = vadd.f32 %v181, %v223
    %v236 = vadd.f32 %v182, %v224
    %v237 = vadd.f32 %v183, %v225
    %v238 = vadd.f32 %v184, %v226
    %v239 = vadd.f32 %v185, %v227
    %v240 = vadd.f32 %v186, %v228
    %v241 = vadd.f32 %v187, %v229
    %v242 = vadd.f32 %v188, %v230
    %v243 = vadd.f32 %v189, %v231
    %v244 = vadd.f32 %v190, %v232
    %v245 = vadd.f32 %v191, %v233
    %v246 = vadd.f32 %v192, %v234
    %s247 = scalar_lea.vmem %s1, 2
    %v248 = vld [vmem:[%s247] ss:$4 sm:$0xff]
    %s249 = scalar_lea.vmem %s1, 34
    %v250 = vld [vmem:[%s249] ss:$4 sm:$0xf]
    %v253 = vperm.slane %v248, 0
    %v254 = vperm.slane %v248, 1
    %v255 = vperm.slane %v248, 2
    %v256 = vperm.slane %v248, 3
    %v257 = vperm.slane %v248, 4
    %v258 = vperm.slane %v248, 5
    %v259 = vperm.slane %v248, 6
    %v260 = vperm.slane %v248, 7
    %v261 = vperm.slane %v250, 0
    %v262 = vperm.slane %v250, 1
    %v263 = vperm.slane %v250, 2
    %v264 = vperm.slane %v250, 3
    %v277 = vadd.f32 %v235, %v253
    %v278 = vadd.f32 %v236, %v254
    %v279 = vadd.f32 %v237, %v255
    %v280 = vadd.f32 %v238, %v256
    %v281 = vadd.f32 %v239, %v257
    %v282 = vadd.f32 %v240, %v258
    %v283 = vadd.f32 %v241, %v259
    %v284 = vadd.f32 %v242, %v260
    %v285 = vadd.f32 %v243, %v261
    %v286 = vadd.f32 %v244, %v262
    %v287 = vadd.f32 %v245, %v263
    %v288 = vadd.f32 %v246, %v264
    %v289 = vld [vmem:[#allocation2] sm:$0xff]
    %v290 = vld [vmem:[#allocation2 + $0x8] sm:$0xff]
    %v291 = vld [vmem:[#allocation2 + $0x10] sm:$0xff]
    %v292 = vld [vmem:[#allocation2 + $0x18] sm:$0xff]
    %v293 = vld [vmem:[#allocation2 + $0x20] sm:$0xff]
    %v294 = vld [vmem:[#allocation2 + $0x28] sm:$0xff]
    %v295 = vld [vmem:[#allocation2 + $0x30] sm:$0xff]
    %v296 = vld [vmem:[#allocation2 + $0x38] sm:$0xff]
    %v297 = vld [vmem:[#allocation2 + $0x40] sm:$0xff]
    %v298 = vld [vmem:[#allocation2 + $0x48] sm:$0xff]
    %v299 = vld [vmem:[#allocation2 + $0x50] sm:$0xff]
    %v300 = vld [vmem:[#allocation2 + $0x58] sm:$0xff]
    %v301 = vld [vmem:[#allocation2 + $0x60] sm:$0xff]
    %v302 = vld [vmem:[#allocation2 + $0x68] sm:$0xff]
    %v303 = vld [vmem:[#allocation2 + $0x70] sm:$0xff]
    %v304 = vld [vmem:[#allocation2 + $0x78] sm:$0xff]
    %v305 = vld [vmem:[#allocation2 + $0x80] sm:$0xff]
    %v306 = vld [vmem:[#allocation2 + $0x88] sm:$0xff]
    %v307 = vld [vmem:[#allocation2 + $0x90] sm:$0xff]
    %v308 = vld [vmem:[#allocation2 + $0x98] sm:$0xff]
    %v309 = vld [vmem:[#allocation2 + $0xa0] sm:$0xff]
    %v310 = vld [vmem:[#allocation2 + $0xa8] sm:$0xff]
    %v311 = vld [vmem:[#allocation2 + $0xb0] sm:$0xff]
    %v312 = vld [vmem:[#allocation2 + $0xb8] sm:$0xff]
    %v313 = vld [vmem:[#allocation2 + $0xc0] sm:$0xff]
    %v314 = vld [vmem:[#allocation2 + $0xc8] sm:$0xff]
    %v315 = vld [vmem:[#allocation2 + $0xd0] sm:$0xff]
    %v316 = vld [vmem:[#allocation2 + $0xd8] sm:$0xff]
    %v317 = vld [vmem:[#allocation2 + $0xe0] sm:$0xff]
    %v318 = vld [vmem:[#allocation2 + $0xe8] sm:$0xff]
    %v319 = vld [vmem:[#allocation2 + $0xf0] sm:$0xff]
    %v320 = vld [vmem:[#allocation2 + $0xf8] sm:$0xff]
    %v321 = vld [vmem:[#allocation2 + $0x100] sm:$0xff]
    %v322 = vld [vmem:[#allocation2 + $0x108] sm:$0xff]
    %v323 = vld [vmem:[#allocation2 + $0x110] sm:$0xff]
    %v324 = vld [vmem:[#allocation2 + $0x118] sm:$0xff]
    %v325 = vld [vmem:[#allocation2 + $0x120] sm:$0xff]
    %v326 = vld [vmem:[#allocation2 + $0x128] sm:$0xff]
    %v327 = vld [vmem:[#allocation2 + $0x130] sm:$0xff]
    %v328 = vld [vmem:[#allocation2 + $0x138] sm:$0xff]
    %v329 = vld [vmem:[#allocation2 + $0x140] sm:$0xff]
    %v330 = vld [vmem:[#allocation2 + $0x148] sm:$0xff]
    %v331 = vld [vmem:[#allocation2 + $0x150] sm:$0xff]
    %v332 = vld [vmem:[#allocation2 + $0x158] sm:$0xff]
    %v333 = vld [vmem:[#allocation2 + $0x160] sm:$0xff]
    %v334 = vld [vmem:[#allocation2 + $0x168] sm:$0xff]
    %v335 = vld [vmem:[#allocation2 + $0x170] sm:$0xff]
    %v336 = vld [vmem:[#allocation2 + $0x178] sm:$0xff]
    %v337 = vld [vmem:[#allocation2 + $0x180] sm:$0xff]
    %v338 = vld [vmem:[#allocation2 + $0x188] sm:$0xff]
    %v339 = vld [vmem:[#allocation2 + $0x190] sm:$0xff]
    %v340 = vld [vmem:[#allocation2 + $0x198] sm:$0xff]
    %v341 = vld [vmem:[#allocation2 + $0x1a0] sm:$0xff]
    %v342 = vld [vmem:[#allocation2 + $0x1a8] sm:$0xff]
    %v343 = vld [vmem:[#allocation2 + $0x1b0] sm:$0xff]
    %v344 = vld [vmem:[#allocation2 + $0x1b8] sm:$0xff]
    %v345 = vld [vmem:[#allocation2 + $0x1c0] sm:$0xff]
    %v346 = vld [vmem:[#allocation2 + $0x1c8] sm:$0xff]
    %v347 = vld [vmem:[#allocation2 + $0x1d0] sm:$0xff]
    %v348 = vld [vmem:[#allocation2 + $0x1d8] sm:$0xff]
    %v349 = vld [vmem:[#allocation2 + $0x1e0] sm:$0xff]
    %v350 = vld [vmem:[#allocation2 + $0x1e8] sm:$0xff]
    %v351 = vld [vmem:[#allocation2 + $0x1f0] sm:$0xff]
    %v352 = vld [vmem:[#allocation2 + $0x1f8] sm:$0xff]
    %v353 = vld [vmem:[#allocation2 + $0x200] sm:$0xff]
    %v354 = vld [vmem:[#allocation2 + $0x208] sm:$0xff]
    %v355 = vld [vmem:[#allocation2 + $0x210] sm:$0xff]
    %v356 = vld [vmem:[#allocation2 + $0x218] sm:$0xff]
    %v357 = vld [vmem:[#allocation2 + $0x220] sm:$0xff]
    %v358 = vld [vmem:[#allocation2 + $0x228] sm:$0xff]
    %v359 = vld [vmem:[#allocation2 + $0x230] sm:$0xff]
    %v360 = vld [vmem:[#allocation2 + $0x238] sm:$0xff]
    %v361 = vld [vmem:[#allocation2 + $0x240] sm:$0xff]
    %v362 = vld [vmem:[#allocation2 + $0x248] sm:$0xff]
    %v363 = vld [vmem:[#allocation2 + $0x250] sm:$0xff]
    %v364 = vld [vmem:[#allocation2 + $0x258] sm:$0xff]
    %v365 = vld [vmem:[#allocation2 + $0x260] sm:$0xff]
    %v366 = vld [vmem:[#allocation2 + $0x268] sm:$0xff]
    %v367 = vld [vmem:[#allocation2 + $0x270] sm:$0xff]
    %v368 = vld [vmem:[#allocation2 + $0x278] sm:$0xff]
    %v369 = vld [vmem:[#allocation2 + $0x280] sm:$0xff]
    %v370 = vld [vmem:[#allocation2 + $0x288] sm:$0xff]
    %v371 = vld [vmem:[#allocation2 + $0x290] sm:$0xff]
    %v372 = vld [vmem:[#allocation2 + $0x298] sm:$0xff]
    %v373 = vld [vmem:[#allocation2 + $0x2a0] sm:$0xff]
    %v374 = vld [vmem:[#allocation2 + $0x2a8] sm:$0xff]
    %v375 = vld [vmem:[#allocation2 + $0x2b0] sm:$0xff]
    %v376 = vld [vmem:[#allocation2 + $0x2b8] sm:$0xff]
    %v377 = vld [vmem:[#allocation2 + $0x2c0] sm:$0xff]
    %v378 = vld [vmem:[#allocation2 + $0x2c8] sm:$0xff]
    %v379 = vld [vmem:[#allocation2 + $0x2d0] sm:$0xff]
    %v380 = vld [vmem:[#allocation2 + $0x2d8] sm:$0xff]
    %v381 = vld [vmem:[#allocation2 + $0x2e0] sm:$0xff]
    %v382 = vld [vmem:[#allocation2 + $0x2e8] sm:$0xff]
    %v383 = vld [vmem:[#allocation2 + $0x2f0] sm:$0xff]
    %v384 = vld [vmem:[#allocation2 + $0x2f8] sm:$0xff]
    %v385 = vld [vmem:[#allocation2 + $0x300] sm:$0xff]
    %v386 = vld [vmem:[#allocation2 + $0x308] sm:$0xff]
    %v387 = vld [vmem:[#allocation2 + $0x310] sm:$0xff]
    %v388 = vld [vmem:[#allocation2 + $0x318] sm:$0xff]
    %v389 = vld [vmem:[#allocation2 + $0x320] sm:$0xff]
    %v390 = vld [vmem:[#allocation2 + $0x328] sm:$0xff]
    %v391 = vld [vmem:[#allocation2 + $0x330] sm:$0xff]
    %v392 = vld [vmem:[#allocation2 + $0x338] sm:$0xff]
    %v393 = vld [vmem:[#allocation2 + $0x340] sm:$0xff]
    %v394 = vld [vmem:[#allocation2 + $0x348] sm:$0xff]
    %v395 = vld [vmem:[#allocation2 + $0x350] sm:$0xff]
    %v396 = vld [vmem:[#allocation2 + $0x358] sm:$0xff]
    %v397 = vld [vmem:[#allocation2 + $0x360] sm:$0xff]
    %v398 = vld [vmem:[#allocation2 + $0x368] sm:$0xff]
    %v399 = vld [vmem:[#allocation2 + $0x370] sm:$0xff]
    %v400 = vld [vmem:[#allocation2 + $0x378] sm:$0xff]
    %v401 = vld [vmem:[#allocation2 + $0x380] sm:$0xff]
    %v402 = vld [vmem:[#allocation2 + $0x388] sm:$0xff]
    %v403 = vld [vmem:[#allocation2 + $0x390] sm:$0xff]
    %v404 = vld [vmem:[#allocation2 + $0x398] sm:$0xff]
    %v405 = vld [vmem:[#allocation2 + $0x3a0] sm:$0xff]
    %v406 = vld [vmem:[#allocation2 + $0x3a8] sm:$0xff]
    %v407 = vld [vmem:[#allocation2 + $0x3b0] sm:$0xff]
    %v408 = vld [vmem:[#allocation2 + $0x3b8] sm:$0xff]
    %v409 = vld [vmem:[#allocation2 + $0x3c0] sm:$0xff]
    %v410 = vld [vmem:[#allocation2 + $0x3c8] sm:$0xff]
    %v411 = vld [vmem:[#allocation2 + $0x3d0] sm:$0xff]
    %v412 = vld [vmem:[#allocation2 + $0x3d8] sm:$0xff]
    %v413 = vld [vmem:[#allocation2 + $0x3e0] sm:$0xff]
    %v414 = vld [vmem:[#allocation2 + $0x3e8] sm:$0xff]
    %v415 = vld [vmem:[#allocation2 + $0x3f0] sm:$0xff]
    %v416 = vld [vmem:[#allocation2 + $0x3f8] sm:$0xff]
    %v417 = vld [vmem:[#allocation2 + $0x400] sm:$0xff]
    %v418 = vld [vmem:[#allocation2 + $0x408] sm:$0xff]
    %v419 = vld [vmem:[#allocation2 + $0x410] sm:$0xff]
    %v420 = vld [vmem:[#allocation2 + $0x418] sm:$0xff]
    %v421 = vld [vmem:[#allocation2 + $0x420] sm:$0xff]
    %v422 = vld [vmem:[#allocation2 + $0x428] sm:$0xff]
    %v423 = vld [vmem:[#allocation2 + $0x430] sm:$0xff]
    %v424 = vld [vmem:[#allocation2 + $0x438] sm:$0xff]
    %v425 = vld [vmem:[#allocation2 + $0x440] sm:$0xff]
    %v426 = vld [vmem:[#allocation2 + $0x448] sm:$0xff]
    %v427 = vld [vmem:[#allocation2 + $0x450] sm:$0xff]
    %v428 = vld [vmem:[#allocation2 + $0x458] sm:$0xff]
    %v429 = vld [vmem:[#allocation2 + $0x460] sm:$0xff]
    %v430 = vld [vmem:[#allocation2 + $0x468] sm:$0xff]
    %v431 = vld [vmem:[#allocation2 + $0x470] sm:$0xff]
    %v432 = vld [vmem:[#allocation2 + $0x478] sm:$0xff]
    %v433 = vld [vmem:[#allocation2 + $0x480] sm:$0xff]
    %v434 = vld [vmem:[#allocation2 + $0x488] sm:$0xff]
    %v435 = vld [vmem:[#allocation2 + $0x490] sm:$0xff]
    %v436 = vld [vmem:[#allocation2 + $0x498] sm:$0xff]
    %v437 = vld [vmem:[#allocation2 + $0x4a0] sm:$0xff]
    %v438 = vld [vmem:[#allocation2 + $0x4a8] sm:$0xff]
    %v439 = vld [vmem:[#allocation2 + $0x4b0] sm:$0xff]
    %v440 = vld [vmem:[#allocation2 + $0x4b8] sm:$0xff]
    %v441 = vld [vmem:[#allocation2 + $0x4c0] sm:$0xff]
    %v442 = vld [vmem:[#allocation2 + $0x4c8] sm:$0xff]
    %v443 = vld [vmem:[#allocation2 + $0x4d0] sm:$0xff]
    %v444 = vld [vmem:[#allocation2 + $0x4d8] sm:$0xff]
    %v445 = vld [vmem:[#allocation2 + $0x4e0] sm:$0xff]
    %v446 = vld [vmem:[#allocation2 + $0x4e8] sm:$0xff]
    %v447 = vld [vmem:[#allocation2 + $0x4f0] sm:$0xff]
    %v448 = vld [vmem:[#allocation2 + $0x4f8] sm:$0xff]
    %v449 = vld [vmem:[#allocation2 + $0x500] sm:$0xff]
    %v450 = vld [vmem:[#allocation2 + $0x508] sm:$0xff]
    %v451 = vld [vmem:[#allocation2 + $0x510] sm:$0xff]
    %v452 = vld [vmem:[#allocation2 + $0x518] sm:$0xff]
    %v453 = vld [vmem:[#allocation2 + $0x520] sm:$0xff]
    %v454 = vld [vmem:[#allocation2 + $0x528] sm:$0xff]
    %v455 = vld [vmem:[#allocation2 + $0x530] sm:$0xff]
    %v456 = vld [vmem:[#allocation2 + $0x538] sm:$0xff]
    %v457 = vld [vmem:[#allocation2 + $0x540] sm:$0xff]
    %v458 = vld [vmem:[#allocation2 + $0x548] sm:$0xff]
    %v459 = vld [vmem:[#allocation2 + $0x550] sm:$0xff]
    %v460 = vld [vmem:[#allocation2 + $0x558] sm:$0xff]
    %v461 = vld [vmem:[#allocation2 + $0x560] sm:$0xff]
    %v462 = vld [vmem:[#allocation2 + $0x568] sm:$0xff]
    %v463 = vld [vmem:[#allocation2 + $0x570] sm:$0xff]
    %v464 = vld [vmem:[#allocation2 + $0x578] sm:$0xff]
    %v465 = vld [vmem:[#allocation2 + $0x580] sm:$0xff]
    %v466 = vld [vmem:[#allocation2 + $0x588] sm:$0xff]
    %v467 = vld [vmem:[#allocation2 + $0x590] sm:$0xff]
    %v468 = vld [vmem:[#allocation2 + $0x598] sm:$0xff]
    %v469 = vld [vmem:[#allocation2 + $0x5a0] sm:$0xff]
    %v470 = vld [vmem:[#allocation2 + $0x5a8] sm:$0xff]
    %v471 = vld [vmem:[#allocation2 + $0x5b0] sm:$0xff]
    %v472 = vld [vmem:[#allocation2 + $0x5b8] sm:$0xff]
    %v473 = vld [vmem:[#allocation2 + $0x5c0] sm:$0xff]
    %v474 = vld [vmem:[#allocation2 + $0x5c8] sm:$0xff]
    %v475 = vld [vmem:[#allocation2 + $0x5d0] sm:$0xff]
    %v476 = vld [vmem:[#allocation2 + $0x5d8] sm:$0xff]
    %v477 = vld [vmem:[#allocation2 + $0x5e0] sm:$0xff]
    %v478 = vld [vmem:[#allocation2 + $0x5e8] sm:$0xff]
    %v479 = vld [vmem:[#allocation2 + $0x5f0] sm:$0xff]
    %v480 = vld [vmem:[#allocation2 + $0x5f8] sm:$0xff]
    %v481 = vld [vmem:[%s3] sm:$0x1]
    %v482 = vperm.slane %v481, 0
    %483 = vmatpush.msra.mxu0 %v304
    %484 = vmatpush.msra.mxu0 %v303
    %485 = vmatpush.msra.mxu0 %v302
    %486 = vmatpush.msra.mxu0 %v301
    %487 = vmatpush.msra.mxu0 %v300
    %488 = vmatpush.msra.mxu0 %v299
    %489 = vmatpush.msra.mxu0 %v298
    %490 = vmatpush.msra.mxu0 %v297
    %491 = vmatpush.msra.mxu0 %v296
    %492 = vmatpush.msra.mxu0 %v295
    %493 = vmatpush.msra.mxu0 %v294
    %494 = vmatpush.msra.mxu0 %v293
    %495 = vmatpush.msra.mxu0 %v292
    %496 = vmatpush.msra.mxu0 %v291
    %497 = vmatpush.msra.mxu0 %v290
    %498 = vmatpush.msra.mxu0 %v289
    %499 = vmatmul.f32.gmra.mxu0 %v277
    %v500 = vpop.f32.mrf.mxu0
    %v501 = vadd.f32 %v482, %v500
    %502 = vdwg.mxu0
    %503 = vmatpush.msra.mxu0 %v320
    %504 = vmatpush.msra.mxu0 %v319
    %505 = vmatpush.msra.mxu0 %v318
    %506 = vmatpush.msra.mxu0 %v317
    %507 = vmatpush.msra.mxu0 %v316
    %508 = vmatpush.msra.mxu0 %v315
    %509 = vmatpush.msra.mxu0 %v314
    %510 = vmatpush.msra.mxu0 %v313
    %511 = vmatpush.msra.mxu0 %v312
    %512 = vmatpush.msra.mxu0 %v311
    %513 = vmatpush.msra.mxu0 %v310
    %514 = vmatpush.msra.mxu0 %v309
    %515 = vmatpush.msra.mxu0 %v308
    %516 = vmatpush.msra.mxu0 %v307
    %517 = vmatpush.msra.mxu0 %v306
    %518 = vmatpush.msra.mxu0 %v305
    %519 = vmatmul.f32.gmra.mxu0 %v278
    %v520 = vpop.f32.mrf.mxu0
    %v521 = vadd.f32 %v501, %v520
    %522 = vdwg.mxu0
    %523 = vmatpush.msra.mxu0 %v336
    %524 = vmatpush.msra.mxu0 %v335
    %525 = vmatpush.msra.mxu0 %v334
    %526 = vmatpush.msra.mxu0 %v333
    %527 = vmatpush.msra.mxu0 %v332
    %528 = vmatpush.msra.mxu0 %v331
    %529 = vmatpush.msra.mxu0 %v330
    %530 = vmatpush.msra.mxu0 %v329
    %531 = vmatpush.msra.mxu0 %v328
    %532 = vmatpush.msra.mxu0 %v327
    %533 = vmatpush.msra.mxu0 %v326
    %534 = vmatpush.msra.mxu0 %v325
    %535 = vmatpush.msra.mxu0 %v324
    %536 = vmatpush.msra.mxu0 %v323
    %537 = vmatpush.msra.mxu0 %v322
    %538 = vmatpush.msra.mxu0 %v321
    %539 = vmatmul.f32.gmra.mxu0 %v279
    %v540 = vpop.f32.mrf.mxu0
    %v541 = vadd.f32 %v521, %v540
    %542 = vdwg.mxu0
    %543 = vmatpush.msra.mxu0 %v352
    %544 = vmatpush.msra.mxu0 %v351
    %545 = vmatpush.msra.mxu0 %v350
    %546 = vmatpush.msra.mxu0 %v349
    %547 = vmatpush.msra.mxu0 %v348
    %548 = vmatpush.msra.mxu0 %v347
    %549 = vmatpush.msra.mxu0 %v346
    %550 = vmatpush.msra.mxu0 %v345
    %551 = vmatpush.msra.mxu0 %v344
    %552 = vmatpush.msra.mxu0 %v343
    %553 = vmatpush.msra.mxu0 %v342
    %554 = vmatpush.msra.mxu0 %v341
    %555 = vmatpush.msra.mxu0 %v340
    %556 = vmatpush.msra.mxu0 %v339
    %557 = vmatpush.msra.mxu0 %v338
    %558 = vmatpush.msra.mxu0 %v337
    %559 = vmatmul.f32.gmra.mxu0 %v280
    %v560 = vpop.f32.mrf.mxu0
    %v561 = vadd.f32 %v541, %v560
    %562 = vdwg.mxu0
    %563 = vmatpush.msra.mxu0 %v368
    %564 = vmatpush.msra.mxu0 %v367
    %565 = vmatpush.msra.mxu0 %v366
    %566 = vmatpush.msra.mxu0 %v365
    %567 = vmatpush.msra.mxu0 %v364
    %568 = vmatpush.msra.mxu0 %v363
    %569 = vmatpush.msra.mxu0 %v362
    %570 = vmatpush.msra.mxu0 %v361
    %571 = vmatpush.msra.mxu0 %v360
    %572 = vmatpush.msra.mxu0 %v359
    %573 = vmatpush.msra.mxu0 %v358
    %574 = vmatpush.msra.mxu0 %v357
    %575 = vmatpush.msra.mxu0 %v356
    %576 = vmatpush.msra.mxu0 %v355
    %577 = vmatpush.msra.mxu0 %v354
    %578 = vmatpush.msra.mxu0 %v353
    %579 = vmatmul.f32.gmra.mxu0 %v281
    %v580 = vpop.f32.mrf.mxu0
    %v581 = vadd.f32 %v561, %v580
    %582 = vdwg.mxu0
    %583 = vmatpush.msra.mxu0 %v384
    %584 = vmatpush.msra.mxu0 %v383
    %585 = vmatpush.msra.mxu0 %v382
    %586 = vmatpush.msra.mxu0 %v381
    %587 = vmatpush.msra.mxu0 %v380
    %588 = vmatpush.msra.mxu0 %v379
    %589 = vmatpush.msra.mxu0 %v378
    %590 = vmatpush.msra.mxu0 %v377
    %591 = vmatpush.msra.mxu0 %v376
    %592 = vmatpush.msra.mxu0 %v375
    %593 = vmatpush.msra.mxu0 %v374
    %594 = vmatpush.msra.mxu0 %v373
    %595 = vmatpush.msra.mxu0 %v372
    %596 = vmatpush.msra.mxu0 %v371
    %597 = vmatpush.msra.mxu0 %v370
    %598 = vmatpush.msra.mxu0 %v369
    %599 = vmatmul.f32.gmra.mxu0 %v282
    %v600 = vpop.f32.mrf.mxu0
    %v601 = vadd.f32 %v581, %v600
    %602 = vdwg.mxu0
    %603 = vmatpush.msra.mxu0 %v400
    %604 = vmatpush.msra.mxu0 %v399
    %605 = vmatpush.msra.mxu0 %v398
    %606 = vmatpush.msra.mxu0 %v397
    %607 = vmatpush.msra.mxu0 %v396
    %608 = vmatpush.msra.mxu0 %v395
    %609 = vmatpush.msra.mxu0 %v394
    %610 = vmatpush.msra.mxu0 %v393
    %611 = vmatpush.msra.mxu0 %v392
    %612 = vmatpush.msra.mxu0 %v391
    %613 = vmatpush.msra.mxu0 %v390
    %614 = vmatpush.msra.mxu0 %v389
    %615 = vmatpush.msra.mxu0 %v388
    %616 = vmatpush.msra.mxu0 %v387
    %617 = vmatpush.msra.mxu0 %v386
    %618 = vmatpush.msra.mxu0 %v385
    %619 = vmatmul.f32.gmra.mxu0 %v283
    %v620 = vpop.f32.mrf.mxu0
    %v621 = vadd.f32 %v601, %v620
    %622 = vdwg.mxu0
    %623 = vmatpush.msra.mxu0 %v416
    %624 = vmatpush.msra.mxu0 %v415
    %625 = vmatpush.msra.mxu0 %v414
    %626 = vmatpush.msra.mxu0 %v413
    %627 = vmatpush.msra.mxu0 %v412
    %628 = vmatpush.msra.mxu0 %v411
    %629 = vmatpush.msra.mxu0 %v410
    %630 = vmatpush.msra.mxu0 %v409
    %631 = vmatpush.msra.mxu0 %v408
    %632 = vmatpush.msra.mxu0 %v407
    %633 = vmatpush.msra.mxu0 %v406
    %634 = vmatpush.msra.mxu0 %v405
    %635 = vmatpush.msra.mxu0 %v404
    %636 = vmatpush.msra.mxu0 %v403
    %637 = vmatpush.msra.mxu0 %v402
    %638 = vmatpush.msra.mxu0 %v401
    %639 = vmatmul.f32.gmra.mxu0 %v284
    %v640 = vpop.f32.mrf.mxu0
    %v641 = vadd.f32 %v621, %v640
    %642 = vdwg.mxu0
    %643 = vmatpush.msra.mxu0 %v432
    %644 = vmatpush.msra.mxu0 %v431
    %645 = vmatpush.msra.mxu0 %v430
    %646 = vmatpush.msra.mxu0 %v429
    %647 = vmatpush.msra.mxu0 %v428
    %648 = vmatpush.msra.mxu0 %v427
    %649 = vmatpush.msra.mxu0 %v426
    %650 = vmatpush.msra.mxu0 %v425
    %651 = vmatpush.msra.mxu0 %v424
    %652 = vmatpush.msra.mxu0 %v423
    %653 = vmatpush.msra.mxu0 %v422
    %654 = vmatpush.msra.mxu0 %v421
    %655 = vmatpush.msra.mxu0 %v420
    %656 = vmatpush.msra.mxu0 %v419
    %657 = vmatpush.msra.mxu0 %v418
    %658 = vmatpush.msra.mxu0 %v417
    %659 = vmatmul.f32.gmra.mxu0 %v285
    %v660 = vpop.f32.mrf.mxu0
    %v661 = vadd.f32 %v641, %v660
    %662 = vdwg.mxu0
    %663 = vmatpush.msra.mxu0 %v448
    %664 = vmatpush.msra.mxu0 %v447
    %665 = vmatpush.msra.mxu0 %v446
    %666 = vmatpush.msra.mxu0 %v445
    %667 = vmatpush.msra.mxu0 %v444
    %668 = vmatpush.msra.mxu0 %v443
    %669 = vmatpush.msra.mxu0 %v442
    %670 = vmatpush.msra.mxu0 %v441
    %671 = vmatpush.msra.mxu0 %v440
    %672 = vmatpush.msra.mxu0 %v439
    %673 = vmatpush.msra.mxu0 %v438
    %674 = vmatpush.msra.mxu0 %v437
    %675 = vmatpush.msra.mxu0 %v436
    %676 = vmatpush.msra.mxu0 %v435
    %677 = vmatpush.msra.mxu0 %v434
    %678 = vmatpush.msra.mxu0 %v433
    %679 = vmatmul.f32.gmra.mxu0 %v286
    %v680 = vpop.f32.mrf.mxu0
    %v681 = vadd.f32 %v661, %v680
    %682 = vdwg.mxu0
    %683 = vmatpush.msra.mxu0 %v464
    %684 = vmatpush.msra.mxu0 %v463
    %685 = vmatpush.msra.mxu0 %v462
    %686 = vmatpush.msra.mxu0 %v461
    %687 = vmatpush.msra.mxu0 %v460
    %688 = vmatpush.msra.mxu0 %v459
    %689 = vmatpush.msra.mxu0 %v458
    %690 = vmatpush.msra.mxu0 %v457
    %691 = vmatpush.msra.mxu0 %v456
    %692 = vmatpush.msra.mxu0 %v455
    %693 = vmatpush.msra.mxu0 %v454
    %694 = vmatpush.msra.mxu0 %v453
    %695 = vmatpush.msra.mxu0 %v452
    %696 = vmatpush.msra.mxu0 %v451
    %697 = vmatpush.msra.mxu0 %v450
    %698 = vmatpush.msra.mxu0 %v449
    %699 = vmatmul.f32.gmra.mxu0 %v287
    %v700 = vpop.f32.mrf.mxu0
    %v701 = vadd.f32 %v681, %v700
    %702 = vdwg.mxu0
    %703 = vmatpush.msra.mxu0 %v480
    %704 = vmatpush.msra.mxu0 %v479
    %705 = vmatpush.msra.mxu0 %v478
    %706 = vmatpush.msra.mxu0 %v477
    %707 = vmatpush.msra.mxu0 %v476
    %708 = vmatpush.msra.mxu0 %v475
    %709 = vmatpush.msra.mxu0 %v474
    %710 = vmatpush.msra.mxu0 %v473
    %711 = vmatpush.msra.mxu0 %v472
    %712 = vmatpush.msra.mxu0 %v471
    %713 = vmatpush.msra.mxu0 %v470
    %714 = vmatpush.msra.mxu0 %v469
    %715 = vmatpush.msra.mxu0 %v468
    %716 = vmatpush.msra.mxu0 %v467
    %717 = vmatpush.msra.mxu0 %v466
    %718 = vmatpush.msra.mxu0 %v465
    %719 = vmatmul.f32.gmra.mxu0 %v288
    %v720 = vpop.f32.mrf.mxu0
    %v721 = vadd.f32 %v701, %v720
    %722 = vdwg.mxu0
    %v723 = vmax.f32 %v721, 0.0
    %v724 = vld [vmem:[#allocation2 + $0x600] sm:$0xff]
    %v725 = vld [vmem:[#allocation2 + $0x608] sm:$0xff]
    %v726 = vld [vmem:[#allocation2 + $0x610] sm:$0xff]
    %v727 = vld [vmem:[#allocation2 + $0x618] sm:$0xff]
    %v728 = vld [vmem:[#allocation2 + $0x620] sm:$0xff]
    %v729 = vld [vmem:[#allocation2 + $0x628] sm:$0xff]
    %v730 = vld [vmem:[#allocation2 + $0x630] sm:$0xff]
    %v731 = vld [vmem:[#allocation2 + $0x638] sm:$0xff]
    %v732 = vld [vmem:[#allocation2 + $0x640] sm:$0xff]
    %v733 = vld [vmem:[#allocation2 + $0x648] sm:$0xff]
    %v734 = vld [vmem:[#allocation2 + $0x650] sm:$0xff]
    %v735 = vld [vmem:[#allocation2 + $0x658] sm:$0xff]
    %v736 = vld [vmem:[#allocation2 + $0x660] sm:$0xff]
    %v737 = vld [vmem:[#allocation2 + $0x668] sm:$0xff]
    %v738 = vld [vmem:[#allocation2 + $0x670] sm:$0xff]
    %v739 = vld [vmem:[#allocation2 + $0x678] sm:$0xff]
    %v740 = vld [vmem:[%s3 + $0x1] sm:$0x1]
    %v741 = vperm.slane %v740, 0
    %742 = vmatpush.msra.mxu0 %v739
    %743 = vmatpush.msra.mxu0 %v738
    %744 = vmatpush.msra.mxu0 %v737
    %745 = vmatpush.msra.mxu0 %v736
    %746 = vmatpush.msra.mxu0 %v735
    %747 = vmatpush.msra.mxu0 %v734
    %748 = vmatpush.msra.mxu0 %v733
    %749 = vmatpush.msra.mxu0 %v732
    %750 = vmatpush.msra.mxu0 %v731
    %751 = vmatpush.msra.mxu0 %v730
    %752 = vmatpush.msra.mxu0 %v729
    %753 = vmatpush.msra.mxu0 %v728
    %754 = vmatpush.msra.mxu0 %v727
    %755 = vmatpush.msra.mxu0 %v726
    %756 = vmatpush.msra.mxu0 %v725
    %757 = vmatpush.msra.mxu0 %v724
    %758 = vmatmul.f32.gmra.mxu0 %v723
    %v759 = vpop.f32.mrf.mxu0
    %v760 = vadd.f32 %v741, %v759
    %761 = vdwg.mxu0
    %v762 = vmax.f32 %v760, 0.0
    %v763 = vld [vmem:[#allocation2 + $0x680] sm:$0xff]
    %v764 = vld [vmem:[#allocation2 + $0x688] sm:$0xff]
    %v765 = vld [vmem:[#allocation2 + $0x690] sm:$0xff]
    %v766 = vld [vmem:[#allocation2 + $0x698] sm:$0xff]
    %v767 = vld [vmem:[#allocation2 + $0x6a0] sm:$0xff]
    %v768 = vld [vmem:[#allocation2 + $0x6a8] sm:$0xff]
    %v769 = vld [vmem:[#allocation2 + $0x6b0] sm:$0xff]
    %v770 = vld [vmem:[#allocation2 + $0x6b8] sm:$0xff]
    %v771 = vld [vmem:[#allocation2 + $0x6c0] sm:$0xff]
    %v772 = vld [vmem:[#allocation2 + $0x6c8] sm:$0xff]
    %v773 = vld [vmem:[#allocation2 + $0x6d0] sm:$0xff]
    %v774 = vld [vmem:[#allocation2 + $0x6d8] sm:$0xff]
    %v775 = vld [vmem:[#allocation2 + $0x6e0] sm:$0xff]
    %v776 = vld [vmem:[#allocation2 + $0x6e8] sm:$0xff]
    %v777 = vld [vmem:[#allocation2 + $0x6f0] sm:$0xff]
    %v778 = vld [vmem:[#allocation2 + $0x6f8] sm:$0xff]
    %v779 = vld [vmem:[%s3 + $0x2] sm:$0x1]
    %v780 = vperm.slane %v779, 0
    %781 = vmatpush.msra.mxu0 %v778
    %782 = vmatpush.msra.mxu0 %v777
    %783 = vmatpush.msra.mxu0 %v776
    %784 = vmatpush.msra.mxu0 %v775
    %785 = vmatpush.msra.mxu0 %v774
    %786 = vmatpush.msra.mxu0 %v773
    %787 = vmatpush.msra.mxu0 %v772
    %788 = vmatpush.msra.mxu0 %v771
    %789 = vmatpush.msra.mxu0 %v770
    %790 = vmatpush.msra.mxu0 %v769
    %791 = vmatpush.msra.mxu0 %v768
    %792 = vmatpush.msra.mxu0 %v767
    %793 = vmatpush.msra.mxu0 %v766
    %794 = vmatpush.msra.mxu0 %v765
    %795 = vmatpush.msra.mxu0 %v764
    %796 = vmatpush.msra.mxu0 %v763
    %797 = vmatmul.f32.gmra.mxu0 %v762
    %v798 = vpop.f32.mrf.mxu0
    %v799 = vadd.f32 %v780, %v798
    %800 = vdwg.mxu0
    %v801 = vmax.f32 %v799, 0.0
    %v802 = vld [vmem:[#allocation2 + $0x700] sm:$0xff]
    %v803 = vld [vmem:[#allocation2 + $0x708] sm:$0xff]
    %v804 = vld [vmem:[#allocation2 + $0x710] sm:$0xff]
    %v805 = vld [vmem:[#allocation2 + $0x718] sm:$0xff]
    %v806 = vld [vmem:[#allocation2 + $0x720] sm:$0xff]
    %v807 = vld [vmem:[#allocation2 + $0x728] sm:$0xff]
    %v808 = vld [vmem:[#allocation2 + $0x730] sm:$0xff]
    %v809 = vld [vmem:[#allocation2 + $0x738] sm:$0xff]
    %v810 = vld [vmem:[#allocation2 + $0x740] sm:$0xff]
    %v811 = vld [vmem:[#allocation2 + $0x748] sm:$0xff]
    %v812 = vld [vmem:[#allocation2 + $0x750] sm:$0xff]
    %v813 = vld [vmem:[#allocation2 + $0x758] sm:$0xff]
    %v814 = vld [vmem:[#allocation2 + $0x760] sm:$0xff]
    %v815 = vld [vmem:[#allocation2 + $0x768] sm:$0xff]
    %v816 = vld [vmem:[#allocation2 + $0x770] sm:$0xff]
    %v817 = vld [vmem:[#allocation2 + $0x778] sm:$0xff]
    %v818 = vld [vmem:[%s3 + $0x3] sm:$0x1]
    %v819 = vperm.slane %v818, 0
    %820 = vmatpush.msra.mxu0 %v817
    %821 = vmatpush.msra.mxu0 %v816
    %822 = vmatpush.msra.mxu0 %v815
    %823 = vmatpush.msra.mxu0 %v814
    %824 = vmatpush.msra.mxu0 %v813
    %825 = vmatpush.msra.mxu0 %v812
    %826 = vmatpush.msra.mxu0 %v811
    %827 = vmatpush.msra.mxu0 %v810
    %828 = vmatpush.msra.mxu0 %v809
    %829 = vmatpush.msra.mxu0 %v808
    %830 = vmatpush.msra.mxu0 %v807
    %831 = vmatpush.msra.mxu0 %v806
    %832 = vmatpush.msra.mxu0 %v805
    %833 = vmatpush.msra.mxu0 %v804
    %834 = vmatpush.msra.mxu0 %v803
    %835 = vmatpush.msra.mxu0 %v802
    %836 = vmatmul.f32.gmra.mxu0 %v801
    %v837 = vpop.f32.mrf.mxu0
    %v838 = vadd.f32 %v819, %v837
    %839 = vdwg.mxu0
    %v840 = vmax.f32 %v838, 0.0
    %v841 = vld [vmem:[#allocation2 + $0x780] sm:$0xff]
    %v842 = vld [vmem:[#allocation2 + $0x788] sm:$0xff]
    %v843 = vld [vmem:[#allocation2 + $0x790] sm:$0xff]
    %v844 = vld [vmem:[#allocation2 + $0x798] sm:$0xff]
    %v845 = vld [vmem:[#allocation2 + $0x7a0] sm:$0xff]
    %v846 = vld [vmem:[#allocation2 + $0x7a8] sm:$0xff]
    %v847 = vld [vmem:[#allocation2 + $0x7b0] sm:$0xff]
    %v848 = vld [vmem:[#allocation2 + $0x7b8] sm:$0xff]
    %v849 = vld [vmem:[#allocation2 + $0x7c0] sm:$0xff]
    %v850 = vld [vmem:[#allocation2 + $0x7c8] sm:$0xff]
    %v851 = vld [vmem:[#allocation2 + $0x7d0] sm:$0xff]
    %v852 = vld [vmem:[#allocation2 + $0x7d8] sm:$0xff]
    %v853 = vld [vmem:[#allocation2 + $0x7e0] sm:$0xff]
    %v854 = vld [vmem:[#allocation2 + $0x7e8] sm:$0xff]
    %v855 = vld [vmem:[#allocation2 + $0x7f0] sm:$0xff]
    %v856 = vld [vmem:[#allocation2 + $0x7f8] sm:$0xff]
    %v857 = vld [vmem:[%s3 + $0x4] sm:$0x1]
    %v858 = vperm.slane %v857, 0
    %859 = vmatpush.msra.mxu0 %v856
    %860 = vmatpush.msra.mxu0 %v855
    %861 = vmatpush.msra.mxu0 %v854
    %862 = vmatpush.msra.mxu0 %v853
    %863 = vmatpush.msra.mxu0 %v852
    %864 = vmatpush.msra.mxu0 %v851
    %865 = vmatpush.msra.mxu0 %v850
    %866 = vmatpush.msra.mxu0 %v849
    %867 = vmatpush.msra.mxu0 %v848
    %868 = vmatpush.msra.mxu0 %v847
    %869 = vmatpush.msra.mxu0 %v846
    %870 = vmatpush.msra.mxu0 %v845
    %871 = vmatpush.msra.mxu0 %v844
    %872 = vmatpush.msra.mxu0 %v843
    %873 = vmatpush.msra.mxu0 %v842
    %874 = vmatpush.msra.mxu0 %v841
    %875 = vmatmul.f32.gmra.mxu0 %v840
    %v876 = vpop.f32.mrf.mxu0
    %v877 = vadd.f32 %v858, %v876
    %878 = vdwg.mxu0
    %879 = vst [vmem:[#allocation5] sm:$0x3] %v877
    // Predicated region
    $region22: #{dffn_forward.1} parent=1 // pred_check
      _
    $region23: #{dffn_forward.1} parent=1 // pred_check_branch
      %881 = sbr.rel (0) target = $region25
    $region24: #{dffn_forward.1} parent=1 // pred_region
      %883 = vsyncadd [#allocation4], 0
      %s885 = sshll.u32 [#allocation5], 4
      %s886 = int_to_ptr.vmem [resolvable:$true] %s885
      %s887 = sshll.u32 %s4, 4
      %s888 = int_to_ptr.hbm [resolvable:$true] %s887
      %890 = dma.vmem_to_hbm [thread:$0]  %s886, 32, %s888, [#allocation4]
    $region25: #{dffn_forward.1} parent=1 // pred_fallthru
      _
    // Predicated region
    $region26: #{dffn_forward.1} parent=1 // pred_check
      _
    $region27: #{dffn_forward.1} parent=1 // pred_check_branch
      %892 = sbr.rel (0) target = $region29
    $region28: #{dffn_forward.1} parent=1 // pred_region
      %894 = dma.done [#allocation4], 32
    $region29: #{dffn_forward.1} parent=1 // pred_fallthru
      _
    %895 = vsyncpa [#allocation3], 1
    %896 = vsyncpa [#allocation4], 1

</llo_original>
